<compile_context>
chip_gen: v7x
topology: tpu7x:2x2x1
jax: 0.10.0
libtpu: 0.0.40
codegen_flags: <defaults>
</compile_context>

<pallas_src>
import jax
import jax.numpy as jnp
from jax import lax
from jax.experimental import pallas as pl
from jax.experimental.pallas import tpu as pltpu


# Below this many bytes per row, a Pallas call is pure launch overhead for a
# traced index — use lax.dynamic_slice instead (slightly lower would also be
# fine on v5e, where slower HBM makes the copy dominate sooner).
_PALLAS_MIN_ROW_BYTES = 512 * 1024
# Minimum bytes per concurrent DMA chunk (extra descriptors only add setup
# latency below this).
_MIN_CHUNK_BYTES = 256 * 1024


def _make_itemgetter_dma_kernel(num_chunks, chunk):
    """Kernel factory: copy one row of a (B, N) HBM array to a (1, N) output.

    num_chunks concurrent DMA descriptors are issued (start-all then wait-all)
    so read and write streams overlap across more DMA queues for multi-MB rows.
    """

    def kernel(item_ref, x_hbm, o_hbm, sem):
        # item_ref: (1,) int32 in SMEM (scalar prefetch) — normalized row index.
        # x_hbm:    (B, N) raw HBM ref (memory_space=pl.ANY).
        # o_hbm:    (1, N) raw HBM ref.
        # sem:      (num_chunks,) DMA completion semaphores.
        row = pl.ds(item_ref[0], 1)
        if num_chunks == 1:
            cp = pltpu.make_async_copy(x_hbm.at[row], o_hbm, sem.at[0])
            cp.start()
            cp.wait()
        else:
            copies = []
            for c in range(num_chunks):
                cols = pl.ds(c * chunk, chunk)  # static start/size
                cp = pltpu.make_async_copy(
                    x_hbm.at[row, cols], o_hbm.at[:, cols], sem.at[c]
                )
                cp.start()
                copies.append(cp)
            for cp in copies:
                cp.wait()

    return kernel


def _pick_num_chunks(n, itemsize):
    """Largest K in {8,4,2} that divides n and keeps chunks >= _MIN_CHUNK_BYTES."""
    row_bytes = n * itemsize
    for k in (8, 4, 2):
        if n % k == 0 and (row_bytes // k) >= _MIN_CHUNK_BYTES:
            return k
    return 1


def itemgetter(x, item, *, force_pallas=False):
    """Equivalent of x[item] for an array x (integer index along axis 0)."""
    B = x.shape[0]
    trailing = x.shape[1:]
    n = 1
    for d in trailing:
        n *= d
    itemsize = jnp.dtype(x.dtype).itemsize
    row_bytes = n * itemsize

    is_static_int = isinstance(item, int) and not isinstance(item, bool)

    if is_static_int:
        # PyTorch raises on OOB static indices.
        if not (-B <= item < B):
            raise IndexError(
                f"index {item} is out of bounds for axis 0 with size {B}")
        if not force_pallas:
            # Fast path: static XLA slice, fuses into consumers, no custom call.
            return x[item]

    # Normalize negative indices (PyTorch allows x[-1]); jnp mod maps any
    # integer into [0, B), also works for traced indices.
    # NOTE: traced indices outside [-B, B) wrap instead of raising (cannot
    # raise from inside a trace).
    idx = jnp.asarray(item, dtype=jnp.int32) % jnp.int32(B)

    if not force_pallas and row_bytes < _PALLAS_MIN_ROW_BYTES:
        # Small traced index: dynamic_slice is cheaper than a pallas_call.
        starts = (idx,) + (jnp.int32(0),) * len(trailing)
        out = lax.dynamic_slice(x, starts, (1,) + trailing)
        return out.reshape(trailing)

    # Lane-dense, contiguous 2-D view of the input (free for the default
    # contiguous layout; for an exotic layout XLA may insert a copy — in that
    # case the plain-indexing fallback above would be preferable).
    x2 = x.reshape(B, n)
    item_arr = idx.reshape(1)

    num_chunks = _pick_num_chunks(n, itemsize)
    chunk = n // num_chunks

    grid_spec = pltpu.PrefetchScalarGridSpec(
        num_scalar_prefetch=1,
        grid=(1,),
        in_specs=[pl.BlockSpec(memory_space=pl.ANY)],   # raw HBM ref, no auto-DMA
        out_specs=pl.BlockSpec(memory_space=pl.ANY),    # raw HBM ref
        scratch_shapes=[pltpu.SemaphoreType.DMA((num_chunks,))],
    )

    out_flat = pl.pallas_call(
        _make_itemgetter_dma_kernel(num_chunks, chunk),
        out_shape=jax.ShapeDtypeStruct((1, n), x.dtype),
        grid_spec=grid_spec,
        compiler_params=pltpu.CompilerParams(
            dimension_semantics=("arbitrary",),
        ),
        # Memory-only custom call: 1 row read + 1 row written.
        cost_estimate=pl.CostEstimate(
            flops=0, transcendentals=0, bytes_accessed=int(2 * row_bytes)),
    )(item_arr, x2)

    return out_flat.reshape(trailing)


class Itemgetter:
    """JAX/Pallas port of the PyTorch Itemgetter module."""

    def __init__(self, item):
        self.item = item

    def __repr__(self):
        return f"Itemgetter({self.item})"

    def __call__(self, x):
        # Plain Python containers mirror PyTorch semantics directly.
        if isinstance(x, (list, tuple, dict)):
            return x[self.item]

        item = self.item
        is_int = (isinstance(item, int) and not isinstance(item, bool)) or (
            isinstance(item, jax.Array)
            and item.ndim == 0
            and jnp.issubdtype(item.dtype, jnp.integer)
        )
        if not is_int:
            # TODO(synk): slice / tuple / bool indices on arrays fall back to plain JAX indexing.
            return x[item]
        return itemgetter(x, item)


if __name__ == "__main__":
    key = jax.random.PRNGKey(0)
    B, C, H, W = 2, 4, 16, 16
    x = jax.random.normal(key, (B, C, H, W), dtype=jnp.float32)

    # Static index fast path (no Pallas, static XLA slice).
    out = jax.block_until_ready(Itemgetter(0)(x))
    ref = x[0]
    assert out.shape == ref.shape and out.dtype == ref.dtype
    assert jnp.array_equal(out, ref), "mismatch vs x[0]"

    # Negative static index (PyTorch semantics).
    out_neg = jax.block_until_ready(Itemgetter(-1)(x))
    assert jnp.array_equal(out_neg, x[-1]), "mismatch vs x[-1]"

    # Small traced index -> dynamic_slice fallback.
    out_dyn = jax.block_until_ready(Itemgetter(jnp.asarray(1, jnp.int32))(x))
    assert jnp.array_equal(out_dyn, x[1]), "mismatch vs x[1] (dynamic_slice path)"

    # Force the Pallas DMA kernel at the small shape (single-chunk DMA).
    out_pal = jax.block_until_ready(
        itemgetter(x, jnp.asarray(1, jnp.int32), force_pallas=True))
    assert jnp.array_equal(out_pal, x[1]), "mismatch vs x[1] (Pallas path)"

    # Larger row (1 MiB) with a traced index: naturally takes the Pallas path
    # and exercises the chunked concurrent-DMA body.
    key2 = jax.random.PRNGKey(0)
    x_big = jax.random.normal(key2, (2, 4, 256, 256), dtype=jnp.float32)
    out_big = jax.block_until_ready(
        Itemgetter(jnp.asarray(0, jnp.int32))(x_big))
    assert jnp.array_equal(out_big, x_big[0]), "mismatch vs x_big[0] (chunked DMA)"

    # Container path (doctest semantics).
    assert Itemgetter(0)([1, 2, 3]) == 1

    print("KERNEL_OK")
</pallas_src>

<mosaic_0001>
module attributes {stable_mosaic.version = 11 : i64} {
  func.func @kernel(%arg0: i32, %arg1: memref<1xi32, #tpu.memory_space<smem>>, %arg2: memref<2x1024xf32, #tpu.memory_space<any>>, %arg3: memref<1x1024xf32, #tpu.memory_space<any>>, %arg4: memref<1x!tpu.dma_semaphore, #tpu.memory_space<semaphore_mem>>) attributes {dimension_semantics = [#tpu.dimension_semantics<arbitrary>], iteration_bounds = array<i64: 1>, scalar_prefetch = 1 : i64, scratch_operands = 1 : i64, tpu.core_type = #tpu.core_type<tc>, window_params = [{}, {}]} {
    %c0 = arith.constant 0 : index
    %0 = memref.load %arg1[%c0] : memref<1xi32, #tpu.memory_space<smem>>
    %c0_i32 = arith.constant 0 : i32
    %c0_i32_0 = arith.constant 0 : i32
    %1 = tpu.memref_slice %arg2[%0, %c0_i32_0] : memref<2x1024xf32, #tpu.memory_space<any>> -> memref<1x1024xf32, #tpu.memory_space<any>>
    %2 = tpu.memref_slice %arg4[%c0_i32] : memref<1x!tpu.dma_semaphore, #tpu.memory_space<semaphore_mem>> -> memref<1x!tpu.dma_semaphore, #tpu.memory_space<semaphore_mem>>
    %3 = tpu.memref_squeeze %2 : memref<1x!tpu.dma_semaphore, #tpu.memory_space<semaphore_mem>> -> memref<!tpu.dma_semaphore, #tpu.memory_space<semaphore_mem>>
    tpu.enqueue_dma source(%1 : memref<1x1024xf32, #tpu.memory_space<any>>) target(%arg3 : memref<1x1024xf32, #tpu.memory_space<any>>) target_semaphore(%3 : memref<!tpu.dma_semaphore, #tpu.memory_space<semaphore_mem>>)
    %c0_i32_1 = arith.constant 0 : i32
    %c0_i32_2 = arith.constant 0 : i32
    %4 = tpu.memref_slice %arg2[%0, %c0_i32_2] : memref<2x1024xf32, #tpu.memory_space<any>> -> memref<1x1024xf32, #tpu.memory_space<any>>
    %5 = tpu.memref_slice %arg4[%c0_i32_1] : memref<1x!tpu.dma_semaphore, #tpu.memory_space<semaphore_mem>> -> memref<1x!tpu.dma_semaphore, #tpu.memory_space<semaphore_mem>>
    %6 = tpu.memref_squeeze %5 : memref<1x!tpu.dma_semaphore, #tpu.memory_space<semaphore_mem>> -> memref<!tpu.dma_semaphore, #tpu.memory_space<semaphore_mem>>
    tpu.wait_dma2 semaphore(%6 : memref<!tpu.dma_semaphore, #tpu.memory_space<semaphore_mem>>) src(%4 : memref<1x1024xf32, #tpu.memory_space<any>>) dst(%arg3 : memref<1x1024xf32, #tpu.memory_space<any>>)
    return
  }
}

</mosaic_0001>

<llo_original>
// kernel: tpu_custom_call.1
$region0: #{tpu_custom_call.1}
  #allocation0 [shape = 'u32[]', space=smem, size = 0x4, offset = 0x4, fixed_abs, tag = 'smem constant byte address 0x4 - core index']
  #allocation1 [shape = 'u32[144,128]{1,0:T(1,128)}', space=vmem, size = 0x12000, scoped, tag = 'internal scratch']
  #allocation2 [shape = 's32[1]{0}', space=sflag, size = 0x4, scoped, tag = 'scratch operand']
  #allocation3 [shape = 's32[1]{0}', space=sflag, size = 0x4, scoped, tag = 'scoped memory for tpu_custom_call.1']
  #allocation4 [shape = 's32[1]{0:T(128)S(6)}', space=smem, size = 0x200, scoped, tag = 'prefetched SMEM operand 0']
  #allocation5 [shape = 's32[]', space=sflag, size = 0x4, offset = 0, fixed_abs, tag = 'sflag constant byte address 0x0 - dummy sync flag']
  %s0 = inlined_call_operand.<no memory space> [shape: s32[1], index: 0, kind: input, shape index: {}]
  %s1 = inlined_call_operand.hbm [shape: f32[2,1024], index: 1, kind: input, shape index: {}]
  %s2 = inlined_call_operand.hbm [shape: f32[1,1024], index: 2, kind: output, shape index: {}]
  %s3 = sld [smem:[#allocation0]]
  $region2: #{tpu_custom_call.1} parent=0
    _
  %s5 = ssub.s32 1, %s3
  %s6 = scalar_select 0, %s5, %s3
  %7 = sst [smem:[#allocation4]] %s0
  $region1: #{tpu_custom_call.1} parent=0
    #allocation6 [shape = 'u32[3]{0}', space=smem, size = 0xc, scoped, tag = 'DMA stride descriptor']
    %s8 = sld [smem:[#allocation4]]
    %s9 = sshrl.u32 %s8, 1
    %s10 = sand.u32 %s8, 1
    %s11 = smul.u32 %s9, 16
    %s12 = sadd.s32 %s10, %s11
    %s13 = smul.addr %s12, 16
    %s14 = scalar_lea.hbm %s1, %s13
    %s16 = sshll.u32 1, 14
    %s17 = sxor.u32 4294967295, %s16
    %s20 = sshll.u32 3, 24
    %s21 = sxor.u32 4294967295, %s20
    %s22 = sand.u32 0, %s21
    %s24 = sor.u32 %s22, 0
    %27 = sst [smem:[#allocation6]] 32
    %s28 = scalar_lea.smem [#allocation6], 1
    %29 = sst [smem:[%s28]] 16
    %s30 = scalar_lea.smem [#allocation6], 2
    %31 = sst [smem:[%s30]] 1
    %33 = dma.general %s14, 128, %s2, [#allocation2], [#allocation5], [#allocation6], %s24, 0
    %s34 = smul.u32 1, 8
    %s35 = sshll.u32 %s34, 4
    %36 = dma.done [#allocation2], %s35
  %37 = vsyncmov [#allocation2]
  %s38 = vpop.sfrf %37
  %p39 = scmp.eq.s32.totalorder %s38, 0
  %p40 = pneg %p39
  %42 = shalt.err (%p40)

</llo_original>
